<compile_context>
chip_gen: v5e
topology: v5e:2x2
jax: 0.10.0
libtpu: 0.0.40
codegen_flags: <defaults>
</compile_context>

<pallas_src>
import jax
import jax.numpy as jnp
from jax.experimental import pallas as pl
from jax.experimental.pallas import tpu as pltpu


def lstm_model_kernel(idx_ref,        # SMEM (T,) int32   (scalar prefetch)
                      xg_tab_ref,     # VMEM (V, 4H)  = emb @ W_ih_f + b_f
                      gb_tab_ref,     # VMEM (V, 4H)  = emb @ W_ih_b + b_b
                      whh_f_ref,      # VMEM (H, 4H)
                      wout_ref,       # VMEM (2H, C)
                      bout_ref,       # VMEM (1, C)
                      o_ref):         # VMEM (1, C)  output (log-probabilities)
    T = idx_ref.shape[0]
    H = whh_f_ref.shape[0]

    whh = whh_f_ref[...]                               # (H, 4H), loaded once

    def gate_combine(gates, c):
        # 2 EUP launches over the full 4H row instead of 4 per-gate slices.
        sig = jax.nn.sigmoid(gates)
        tnh = jnp.tanh(gates)
        i_g = sig[:, 0:H]
        f_g = sig[:, H:2 * H]
        g_g = tnh[:, 2 * H:3 * H]
        o_g = sig[:, 3 * H:4 * H]
        c_new = f_g * c + i_g * g_g
        h_new = o_g * jnp.tanh(c_new)
        return h_new, c_new

    # ---- forward recurrence: fully unrolled; gathers are off the serial chain ----
    h = jnp.zeros((1, H), jnp.float32)
    c = jnp.zeros((1, H), jnp.float32)
    for t in range(T):                                 # T is a trace-time constant
        xg_t = xg_tab_ref[pl.ds(idx_ref[t], 1), :]     # (1, 4H) fused gather (VMEM)
        gates = xg_t + jnp.dot(h, whh, preferred_element_type=jnp.float32)
        h, c = gate_combine(gates, c)
    h_fwd = h

    # ---- backward direction ----
    # lstm_out[-1] for the reverse LSTM equals its state after processing only x[T-1]
    # from the zero initial state, so a single gathered row is exact; with h0 == 0 the
    # h0 @ W_hh_b term vanishes and f * c0 == 0.
    gates_b = gb_tab_ref[pl.ds(idx_ref[T - 1], 1), :]  # (1, 4H) fused gather (VMEM)
    sig_b = jax.nn.sigmoid(gates_b)
    tnh_b = jnp.tanh(gates_b)
    c_b = sig_b[:, 0:H] * tnh_b[:, 2 * H:3 * H]        # i * g
    h_bwd = sig_b[:, 3 * H:4 * H] * jnp.tanh(c_b)

    # ---- output projection (split -> no lane concat) + log_softmax (dim = -1) ----
    logits = (jnp.dot(h_fwd, wout_ref[0:H, :], preferred_element_type=jnp.float32)
              + jnp.dot(h_bwd, wout_ref[H:2 * H, :], preferred_element_type=jnp.float32)
              + bout_ref[...])                         # (1, C)
    m = jnp.max(logits, axis=-1, keepdims=True)
    lse = m + jnp.log(jnp.sum(jnp.exp(logits - m), axis=-1, keepdims=True))
    o_ref[...] = logits - lse


def fold_params(params):
    """Host-side constant folding of the input projections into the embedding table."""
    xg_table = (jnp.dot(params["embedding"], params["w_ih_f"]) + params["b_f"]
                ).astype(jnp.float32)                  # (V, 4H)
    gb_table = (jnp.dot(params["embedding"], params["w_ih_b"]) + params["b_b"]
                ).astype(jnp.float32)                  # (V, 4H)
    return {
        "xg_table": xg_table,
        "gb_table": gb_table,
        "w_hh_f": params["w_hh_f"],
        "w_out": params["w_out"],
        "b_out": params["b_out"],
    }


def lstm_model_forward(indices, folded):
    T = indices.shape[0]
    V = folded["xg_table"].shape[0]
    H = folded["w_hh_f"].shape[0]
    C = folded["b_out"].shape[-1]

    vmem = pl.BlockSpec(memory_space=pltpu.MemorySpace.VMEM)

    # Advisory cost hint so XLA schedules sensibly around the tiny custom call.
    flops = 2 * T * H * 4 * H + 2 * 2 * H * C
    transcendentals = 9 * (T + 1) * H
    bytes_accessed = 4 * (2 * V * 4 * H + H * 4 * H + 2 * H * C + 2 * C) + 4 * T

    grid_spec = pltpu.PrefetchScalarGridSpec(
        num_scalar_prefetch=1,                 # token ids -> SMEM
        grid=(1,),
        in_specs=[vmem, vmem,                  # folded gate tables (auto-DMA'd once)
                  vmem,                        # w_hh_f
                  vmem, vmem],                 # w_out, b_out
        out_specs=vmem,
    )

    return pl.pallas_call(
        lstm_model_kernel,
        out_shape=jax.ShapeDtypeStruct((1, C), jnp.float32),
        grid_spec=grid_spec,
        compiler_params=pltpu.CompilerParams(
            dimension_semantics=("arbitrary",)),
        cost_estimate=pl.CostEstimate(flops=flops,
                                      transcendentals=transcendentals,
                                      bytes_accessed=bytes_accessed),
    )(indices.astype(jnp.int32),
      folded["xg_table"], folded["gb_table"],
      folded["w_hh_f"], folded["w_out"], folded["b_out"])


def init_params(key, vocabsize, embedding_dim, hidden_dim, num_classes):
    ks = jax.random.split(key, 9)
    s = 1.0 / float(hidden_dim) ** 0.5

    def u(k, shape):
        return jax.random.uniform(k, shape, jnp.float32, -s, s)

    H, E, C = hidden_dim, embedding_dim, num_classes
    return {
        "embedding": jax.random.normal(ks[0], (vocabsize, E), jnp.float32),
        # forward-direction LSTM (b_ih + b_hh folded into a single bias)
        "w_ih_f": u(ks[1], (E, 4 * H)),
        "w_hh_f": u(ks[2], (H, 4 * H)),
        "b_f":    u(ks[3], (1, 4 * H)),
        # backward-direction LSTM (w_hh_b exists as a parameter but is mathematically
        # unused for lstm_out[-1] with a zero initial state, so it is not fed to the kernel)
        "w_ih_b": u(ks[4], (E, 4 * H)),
        "w_hh_b": u(ks[5], (H, 4 * H)),
        "b_b":    u(ks[6], (1, 4 * H)),
        # output projection Linear(2H -> C)
        "w_out":  u(ks[7], (2 * H, C)),
        "b_out":  u(ks[8], (1, C)),
    }


if __name__ == "__main__":
    # Small shapes consistent with the module's forward (batch_size = 1).
    seq_len = 8
    vocabsize = 50
    embedding_dim = 32
    hidden_dim = 32
    num_classes = 4

    key = jax.random.PRNGKey(0)
    k_params, k_inputs = jax.random.split(key)
    params = init_params(k_params, vocabsize, embedding_dim, hidden_dim, num_classes)
    folded = fold_params(params)               # one-time host-side weight preprocessing
    inputs = jax.random.randint(k_inputs, (seq_len,), 0, vocabsize, dtype=jnp.int32)

    out = lstm_model_forward(inputs, folded)   # (1, num_classes) log-probabilities
    jax.block_until_ready(out)
    assert out.shape == (1, num_classes)
    print("KERNEL_OK")
</pallas_src>

<mosaic_0001>
module attributes {stable_mosaic.version = 11 : i64} {
  func.func @lstm_model_kernel(%arg0: i32, %arg1: memref<8xi32, #tpu.memory_space<smem>>, %arg2: memref<50x128xf32, #tpu.memory_space<vmem>>, %arg3: memref<50x128xf32, #tpu.memory_space<vmem>>, %arg4: memref<32x128xf32, #tpu.memory_space<vmem>>, %arg5: memref<64x4xf32, #tpu.memory_space<vmem>>, %arg6: memref<1x4xf32, #tpu.memory_space<vmem>>, %arg7: memref<1x4xf32, #tpu.memory_space<vmem>>) attributes {dimension_semantics = [#tpu.dimension_semantics<arbitrary>], iteration_bounds = array<i64: 1>, scalar_prefetch = 1 : i64, scratch_operands = 0 : i64, tpu.core_type = #tpu.core_type<tc>, window_params = [{pipeline_mode = #tpu.pipeline_mode<synchronous>, transform_indices = @transform_0, window_bounds = array<i64: 50, 128>}, {pipeline_mode = #tpu.pipeline_mode<synchronous>, transform_indices = @transform_1, window_bounds = array<i64: 50, 128>}, {pipeline_mode = #tpu.pipeline_mode<synchronous>, transform_indices = @transform_2, window_bounds = array<i64: 32, 128>}, {pipeline_mode = #tpu.pipeline_mode<synchronous>, transform_indices = @transform_3, window_bounds = array<i64: 64, 4>}, {pipeline_mode = #tpu.pipeline_mode<synchronous>, transform_indices = @transform_4, window_bounds = array<i64: 1, 4>}, {pipeline_mode = #tpu.pipeline_mode<synchronous>, transform_indices = @transform_5, window_bounds = array<i64: 1, 4>}]} {
    %c0 = arith.constant 0 : index
    %c0_0 = arith.constant 0 : index
    %0 = vector.load %arg4[%c0, %c0_0] : memref<32x128xf32, #tpu.memory_space<vmem>>, vector<32x128xf32>
    %cst = arith.constant 0.000000e+00 : f32
    %1 = vector.broadcast %cst : f32 to vector<1x32xf32>
    %cst_1 = arith.constant 0.000000e+00 : f32
    %2 = vector.broadcast %cst_1 : f32 to vector<1x32xf32>
    %c0_2 = arith.constant 0 : index
    %3 = memref.load %arg1[%c0_2] : memref<8xi32, #tpu.memory_space<smem>>
    %4 = arith.index_cast %3 : i32 to index
    %c0_3 = arith.constant 0 : index
    %5 = vector.load %arg2[%4, %c0_3] : memref<50x128xf32, #tpu.memory_space<vmem>>, vector<1x128xf32>
    %cst_4 = arith.constant dense<0.000000e+00> : vector<1x128xf32>
    %6 = tpu.matmul %1, %0, %cst_4 {dimension_numbers = #tpu.dot_dimension_numbers<[1], [0], [0], [1], [0, 0, 1, 1], [], []>} : vector<1x32xf32>, vector<32x128xf32>, vector<1x128xf32> -> vector<1x128xf32>
    %7 = arith.addf %5, %6 : vector<1x128xf32>
    %8 = arith.negf %7 : vector<1x128xf32>
    %9 = math.exp %8 : vector<1x128xf32>
    %cst_5 = arith.constant 1.000000e+00 : f32
    %10 = vector.broadcast %cst_5 : f32 to vector<1x128xf32>
    %11 = arith.addf %10, %9 : vector<1x128xf32>
    %12 = arith.divf %10, %11 : vector<1x128xf32>
    %13 = math.tanh %7 : vector<1x128xf32>
    %14 = vector.extract_strided_slice %12 {offsets = [0, 0], sizes = [1, 32], strides = [1, 1]} : vector<1x128xf32> to vector<1x32xf32>
    %15 = vector.extract_strided_slice %12 {offsets = [0, 32], sizes = [1, 32], strides = [1, 1]} : vector<1x128xf32> to vector<1x32xf32>
    %16 = vector.extract_strided_slice %13 {offsets = [0, 64], sizes = [1, 32], strides = [1, 1]} : vector<1x128xf32> to vector<1x32xf32>
    %17 = vector.extract_strided_slice %12 {offsets = [0, 96], sizes = [1, 32], strides = [1, 1]} : vector<1x128xf32> to vector<1x32xf32>
    %18 = arith.mulf %15, %2 : vector<1x32xf32>
    %19 = arith.mulf %14, %16 : vector<1x32xf32>
    %20 = arith.addf %18, %19 : vector<1x32xf32>
    %21 = math.tanh %20 : vector<1x32xf32>
    %22 = arith.mulf %17, %21 : vector<1x32xf32>
    %c1 = arith.constant 1 : index
    %23 = memref.load %arg1[%c1] : memref<8xi32, #tpu.memory_space<smem>>
    %24 = arith.index_cast %23 : i32 to index
    %c0_6 = arith.constant 0 : index
    %25 = vector.load %arg2[%24, %c0_6] : memref<50x128xf32, #tpu.memory_space<vmem>>, vector<1x128xf32>
    %cst_7 = arith.constant dense<0.000000e+00> : vector<1x128xf32>
    %26 = tpu.matmul %22, %0, %cst_7 {dimension_numbers = #tpu.dot_dimension_numbers<[1], [0], [0], [1], [0, 0, 1, 1], [], []>} : vector<1x32xf32>, vector<32x128xf32>, vector<1x128xf32> -> vector<1x128xf32>
    %27 = arith.addf %25, %26 : vector<1x128xf32>
    %28 = arith.negf %27 : vector<1x128xf32>
    %29 = math.exp %28 : vector<1x128xf32>
    %cst_8 = arith.constant 1.000000e+00 : f32
    %30 = vector.broadcast %cst_8 : f32 to vector<1x128xf32>
    %31 = arith.addf %30, %29 : vector<1x128xf32>
    %32 = arith.divf %30, %31 : vector<1x128xf32>
    %33 = math.tanh %27 : vector<1x128xf32>
    %34 = vector.extract_strided_slice %32 {offsets = [0, 0], sizes = [1, 32], strides = [1, 1]} : vector<1x128xf32> to vector<1x32xf32>
    %35 = vector.extract_strided_slice %32 {offsets = [0, 32], sizes = [1, 32], strides = [1, 1]} : vector<1x128xf32> to vector<1x32xf32>
    %36 = vector.extract_strided_slice %33 {offsets = [0, 64], sizes = [1, 32], strides = [1, 1]} : vector<1x128xf32> to vector<1x32xf32>
    %37 = vector.extract_strided_slice %32 {offsets = [0, 96], sizes = [1, 32], strides = [1, 1]} : vector<1x128xf32> to vector<1x32xf32>
    %38 = arith.mulf %35, %20 : vector<1x32xf32>
    %39 = arith.mulf %34, %36 : vector<1x32xf32>
    %40 = arith.addf %38, %39 : vector<1x32xf32>
    %41 = math.tanh %40 : vector<1x32xf32>
    %42 = arith.mulf %37, %41 : vector<1x32xf32>
    %c2 = arith.constant 2 : index
    %43 = memref.load %arg1[%c2] : memref<8xi32, #tpu.memory_space<smem>>
    %44 = arith.index_cast %43 : i32 to index
    %c0_9 = arith.constant 0 : index
    %45 = vector.load %arg2[%44, %c0_9] : memref<50x128xf32, #tpu.memory_space<vmem>>, vector<1x128xf32>
    %cst_10 = arith.constant dense<0.000000e+00> : vector<1x128xf32>
    %46 = tpu.matmul %42, %0, %cst_10 {dimension_numbers = #tpu.dot_dimension_numbers<[1], [0], [0], [1], [0, 0, 1, 1], [], []>} : vector<1x32xf32>, vector<32x128xf32>, vector<1x128xf32> -> vector<1x128xf32>
    %47 = arith.addf %45, %46 : vector<1x128xf32>
    %48 = arith.negf %47 : vector<1x128xf32>
    %49 = math.exp %48 : vector<1x128xf32>
    %cst_11 = arith.constant 1.000000e+00 : f32
    %50 = vector.broadcast %cst_11 : f32 to vector<1x128xf32>
    %51 = arith.addf %50, %49 : vector<1x128xf32>
    %52 = arith.divf %50, %51 : vector<1x128xf32>
    %53 = math.tanh %47 : vector<1x128xf32>
    %54 = vector.extract_strided_slice %52 {offsets = [0, 0], sizes = [1, 32], strides = [1, 1]} : vector<1x128xf32> to vector<1x32xf32>
    %55 = vector.extract_strided_slice %52 {offsets = [0, 32], sizes = [1, 32], strides = [1, 1]} : vector<1x128xf32> to vector<1x32xf32>
    %56 = vector.extract_strided_slice %53 {offsets = [0, 64], sizes = [1, 32], strides = [1, 1]} : vector<1x128xf32> to vector<1x32xf32>
    %57 = vector.extract_strided_slice %52 {offsets = [0, 96], sizes = [1, 32], strides = [1, 1]} : vector<1x128xf32> to vector<1x32xf32>
    %58 = arith.mulf %55, %40 : vector<1x32xf32>
    %59 = arith.mulf %54, %56 : vector<1x32xf32>
    %60 = arith.addf %58, %59 : vector<1x32xf32>
    %61 = math.tanh %60 : vector<1x32xf32>
    %62 = arith.mulf %57, %61 : vector<1x32xf32>
    %c3 = arith.constant 3 : index
    %63 = memref.load %arg1[%c3] : memref<8xi32, #tpu.memory_space<smem>>
    %64 = arith.index_cast %63 : i32 to index
    %c0_12 = arith.constant 0 : index
    %65 = vector.load %arg2[%64, %c0_12] : memref<50x128xf32, #tpu.memory_space<vmem>>, vector<1x128xf32>
    %cst_13 = arith.constant dense<0.000000e+00> : vector<1x128xf32>
    %66 = tpu.matmul %62, %0, %cst_13 {dimension_numbers = #tpu.dot_dimension_numbers<[1], [0], [0], [1], [0, 0, 1, 1], [], []>} : vector<1x32xf32>, vector<32x128xf32>, vector<1x128xf32> -> vector<1x128xf32>
    %67 = arith.addf %65, %66 : vector<1x128xf32>
    %68 = arith.negf %67 : vector<1x128xf32>
    %69 = math.exp %68 : vector<1x128xf32>
    %cst_14 = arith.constant 1.000000e+00 : f32
    %70 = vector.broadcast %cst_14 : f32 to vector<1x128xf32>
    %71 = arith.addf %70, %69 : vector<1x128xf32>
    %72 = arith.divf %70, %71 : vector<1x128xf32>
    %73 = math.tanh %67 : vector<1x128xf32>
    %74 = vector.extract_strided_slice %72 {offsets = [0, 0], sizes = [1, 32], strides = [1, 1]} : vector<1x128xf32> to vector<1x32xf32>
    %75 = vector.extract_strided_slice %72 {offsets = [0, 32], sizes = [1, 32], strides = [1, 1]} : vector<1x128xf32> to vector<1x32xf32>
    %76 = vector.extract_strided_slice %73 {offsets = [0, 64], sizes = [1, 32], strides = [1, 1]} : vector<1x128xf32> to vector<1x32xf32>
    %77 = vector.extract_strided_slice %72 {offsets = [0, 96], sizes = [1, 32], strides = [1, 1]} : vector<1x128xf32> to vector<1x32xf32>
    %78 = arith.mulf %75, %60 : vector<1x32xf32>
    %79 = arith.mulf %74, %76 : vector<1x32xf32>
    %80 = arith.addf %78, %79 : vector<1x32xf32>
    %81 = math.tanh %80 : vector<1x32xf32>
    %82 = arith.mulf %77, %81 : vector<1x32xf32>
    %c4 = arith.constant 4 : index
    %83 = memref.load %arg1[%c4] : memref<8xi32, #tpu.memory_space<smem>>
    %84 = arith.index_cast %83 : i32 to index
    %c0_15 = arith.constant 0 : index
    %85 = vector.load %arg2[%84, %c0_15] : memref<50x128xf32, #tpu.memory_space<vmem>>, vector<1x128xf32>
    %cst_16 = arith.constant dense<0.000000e+00> : vector<1x128xf32>
    %86 = tpu.matmul %82, %0, %cst_16 {dimension_numbers = #tpu.dot_dimension_numbers<[1], [0], [0], [1], [0, 0, 1, 1], [], []>} : vector<1x32xf32>, vector<32x128xf32>, vector<1x128xf32> -> vector<1x128xf32>
    %87 = arith.addf %85, %86 : vector<1x128xf32>
    %88 = arith.negf %87 : vector<1x128xf32>
    %89 = math.exp %88 : vector<1x128xf32>
    %cst_17 = arith.constant 1.000000e+00 : f32
    %90 = vector.broadcast %cst_17 : f32 to vector<1x128xf32>
    %91 = arith.addf %90, %89 : vector<1x128xf32>
    %92 = arith.divf %90, %91 : vector<1x128xf32>
    %93 = math.tanh %87 : vector<1x128xf32>
    %94 = vector.extract_strided_slice %92 {offsets = [0, 0], sizes = [1, 32], strides = [1, 1]} : vector<1x128xf32> to vector<1x32xf32>
    %95 = vector.extract_strided_slice %92 {offsets = [0, 32], sizes = [1, 32], strides = [1, 1]} : vector<1x128xf32> to vector<1x32xf32>
    %96 = vector.extract_strided_slice %93 {offsets = [0, 64], sizes = [1, 32], strides = [1, 1]} : vector<1x128xf32> to vector<1x32xf32>
    %97 = vector.extract_strided_slice %92 {offsets = [0, 96], sizes = [1, 32], strides = [1, 1]} : vector<1x128xf32> to vector<1x32xf32>
    %98 = arith.mulf %95, %80 : vector<1x32xf32>
    %99 = arith.mulf %94, %96 : vector<1x32xf32>
    %100 = arith.addf %98, %99 : vector<1x32xf32>
    %101 = math.tanh %100 : vector<1x32xf32>
    %102 = arith.mulf %97, %101 : vector<1x32xf32>
    %c5 = arith.constant 5 : index
    %103 = memref.load %arg1[%c5] : memref<8xi32, #tpu.memory_space<smem>>
    %104 = arith.index_cast %103 : i32 to index
    %c0_18 = arith.constant 0 : index
    %105 = vector.load %arg2[%104, %c0_18] : memref<50x128xf32, #tpu.memory_space<vmem>>, vector<1x128xf32>
    %cst_19 = arith.constant dense<0.000000e+00> : vector<1x128xf32>
    %106 = tpu.matmul %102, %0, %cst_19 {dimension_numbers = #tpu.dot_dimension_numbers<[1], [0], [0], [1], [0, 0, 1, 1], [], []>} : vector<1x32xf32>, vector<32x128xf32>, vector<1x128xf32> -> vector<1x128xf32>
    %107 = arith.addf %105, %106 : vector<1x128xf32>
    %108 = arith.negf %107 : vector<1x128xf32>
    %109 = math.exp %108 : vector<1x128xf32>
    %cst_20 = arith.constant 1.000000e+00 : f32
    %110 = vector.broadcast %cst_20 : f32 to vector<1x128xf32>
    %111 = arith.addf %110, %109 : vector<1x128xf32>
    %112 = arith.divf %110, %111 : vector<1x128xf32>
    %113 = math.tanh %107 : vector<1x128xf32>
    %114 = vector.extract_strided_slice %112 {offsets = [0, 0], sizes = [1, 32], strides = [1, 1]} : vector<1x128xf32> to vector<1x32xf32>
    %115 = vector.extract_strided_slice %112 {offsets = [0, 32], sizes = [1, 32], strides = [1, 1]} : vector<1x128xf32> to vector<1x32xf32>
    %116 = vector.extract_strided_slice %113 {offsets = [0, 64], sizes = [1, 32], strides = [1, 1]} : vector<1x128xf32> to vector<1x32xf32>
    %117 = vector.extract_strided_slice %112 {offsets = [0, 96], sizes = [1, 32], strides = [1, 1]} : vector<1x128xf32> to vector<1x32xf32>
    %118 = arith.mulf %115, %100 : vector<1x32xf32>
    %119 = arith.mulf %114, %116 : vector<1x32xf32>
    %120 = arith.addf %118, %119 : vector<1x32xf32>
    %121 = math.tanh %120 : vector<1x32xf32>
    %122 = arith.mulf %117, %121 : vector<1x32xf32>
    %c6 = arith.constant 6 : index
    %123 = memref.load %arg1[%c6] : memref<8xi32, #tpu.memory_space<smem>>
    %124 = arith.index_cast %123 : i32 to index
    %c0_21 = arith.constant 0 : index
    %125 = vector.load %arg2[%124, %c0_21] : memref<50x128xf32, #tpu.memory_space<vmem>>, vector<1x128xf32>
    %cst_22 = arith.constant dense<0.000000e+00> : vector<1x128xf32>
    %126 = tpu.matmul %122, %0, %cst_22 {dimension_numbers = #tpu.dot_dimension_numbers<[1], [0], [0], [1], [0, 0, 1, 1], [], []>} : vector<1x32xf32>, vector<32x128xf32>, vector<1x128xf32> -> vector<1x128xf32>
    %127 = arith.addf %125, %126 : vector<1x128xf32>
    %128 = arith.negf %127 : vector<1x128xf32>
    %129 = math.exp %128 : vector<1x128xf32>
    %cst_23 = arith.constant 1.000000e+00 : f32
    %130 = vector.broadcast %cst_23 : f32 to vector<1x128xf32>
    %131 = arith.addf %130, %129 : vector<1x128xf32>
    %132 = arith.divf %130, %131 : vector<1x128xf32>
    %133 = math.tanh %127 : vector<1x128xf32>
    %134 = vector.extract_strided_slice %132 {offsets = [0, 0], sizes = [1, 32], strides = [1, 1]} : vector<1x128xf32> to vector<1x32xf32>
    %135 = vector.extract_strided_slice %132 {offsets = [0, 32], sizes = [1, 32], strides = [1, 1]} : vector<1x128xf32> to vector<1x32xf32>
    %136 = vector.extract_strided_slice %133 {offsets = [0, 64], sizes = [1, 32], strides = [1, 1]} : vector<1x128xf32> to vector<1x32xf32>
    %137 = vector.extract_strided_slice %132 {offsets = [0, 96], sizes = [1, 32], strides = [1, 1]} : vector<1x128xf32> to vector<1x32xf32>
    %138 = arith.mulf %135, %120 : vector<1x32xf32>
    %139 = arith.mulf %134, %136 : vector<1x32xf32>
    %140 = arith.addf %138, %139 : vector<1x32xf32>
    %141 = math.tanh %140 : vector<1x32xf32>
    %142 = arith.mulf %137, %141 : vector<1x32xf32>
    %c7 = arith.constant 7 : index
    %143 = memref.load %arg1[%c7] : memref<8xi32, #tpu.memory_space<smem>>
    %144 = arith.index_cast %143 : i32 to index
    %c0_24 = arith.constant 0 : index
    %145 = vector.load %arg2[%144, %c0_24] : memref<50x128xf32, #tpu.memory_space<vmem>>, vector<1x128xf32>
    %cst_25 = arith.constant dense<0.000000e+00> : vector<1x128xf32>
    %146 = tpu.matmul %142, %0, %cst_25 {dimension_numbers = #tpu.dot_dimension_numbers<[1], [0], [0], [1], [0, 0, 1, 1], [], []>} : vector<1x32xf32>, vector<32x128xf32>, vector<1x128xf32> -> vector<1x128xf32>
    %147 = arith.addf %145, %146 : vector<1x128xf32>
    %148 = arith.negf %147 : vector<1x128xf32>
    %149 = math.exp %148 : vector<1x128xf32>
    %cst_26 = arith.constant 1.000000e+00 : f32
    %150 = vector.broadcast %cst_26 : f32 to vector<1x128xf32>
    %151 = arith.addf %150, %149 : vector<1x128xf32>
    %152 = arith.divf %150, %151 : vector<1x128xf32>
    %153 = math.tanh %147 : vector<1x128xf32>
    %154 = vector.extract_strided_slice %152 {offsets = [0, 0], sizes = [1, 32], strides = [1, 1]} : vector<1x128xf32> to vector<1x32xf32>
    %155 = vector.extract_strided_slice %152 {offsets = [0, 32], sizes = [1, 32], strides = [1, 1]} : vector<1x128xf32> to vector<1x32xf32>
    %156 = vector.extract_strided_slice %153 {offsets = [0, 64], sizes = [1, 32], strides = [1, 1]} : vector<1x128xf32> to vector<1x32xf32>
    %157 = vector.extract_strided_slice %152 {offsets = [0, 96], sizes = [1, 32], strides = [1, 1]} : vector<1x128xf32> to vector<1x32xf32>
    %158 = arith.mulf %155, %140 : vector<1x32xf32>
    %159 = arith.mulf %154, %156 : vector<1x32xf32>
    %160 = arith.addf %158, %159 : vector<1x32xf32>
    %161 = math.tanh %160 : vector<1x32xf32>
    %162 = arith.mulf %157, %161 : vector<1x32xf32>
    %c7_27 = arith.constant 7 : index
    %163 = memref.load %arg1[%c7_27] : memref<8xi32, #tpu.memory_space<smem>>
    %164 = arith.index_cast %163 : i32 to index
    %c0_28 = arith.constant 0 : index
    %165 = vector.load %arg3[%164, %c0_28] : memref<50x128xf32, #tpu.memory_space<vmem>>, vector<1x128xf32>
    %166 = arith.negf %165 : vector<1x128xf32>
    %167 = math.exp %166 : vector<1x128xf32>
    %cst_29 = arith.constant 1.000000e+00 : f32
    %168 = vector.broadcast %cst_29 : f32 to vector<1x128xf32>
    %169 = arith.addf %168, %167 : vector<1x128xf32>
    %170 = arith.divf %168, %169 : vector<1x128xf32>
    %171 = math.tanh %165 : vector<1x128xf32>
    %172 = vector.extract_strided_slice %170 {offsets = [0, 0], sizes = [1, 32], strides = [1, 1]} : vector<1x128xf32> to vector<1x32xf32>
    %173 = vector.extract_strided_slice %171 {offsets = [0, 64], sizes = [1, 32], strides = [1, 1]} : vector<1x128xf32> to vector<1x32xf32>
    %174 = arith.mulf %172, %173 : vector<1x32xf32>
    %175 = vector.extract_strided_slice %170 {offsets = [0, 96], sizes = [1, 32], strides = [1, 1]} : vector<1x128xf32> to vector<1x32xf32>
    %176 = math.tanh %174 : vector<1x32xf32>
    %177 = arith.mulf %175, %176 : vector<1x32xf32>
    %c0_30 = arith.constant 0 : index
    %c0_31 = arith.constant 0 : index
    %178 = vector.load %arg5[%c0_30, %c0_31] : memref<64x4xf32, #tpu.memory_space<vmem>>, vector<32x4xf32>
    %cst_32 = arith.constant dense<0.000000e+00> : vector<1x4xf32>
    %179 = tpu.matmul %162, %178, %cst_32 {dimension_numbers = #tpu.dot_dimension_numbers<[1], [0], [0], [1], [0, 0, 1, 1], [], []>} : vector<1x32xf32>, vector<32x4xf32>, vector<1x4xf32> -> vector<1x4xf32>
    %c32 = arith.constant 32 : index
    %c0_33 = arith.constant 0 : index
    %180 = vector.load %arg5[%c32, %c0_33] : memref<64x4xf32, #tpu.memory_space<vmem>>, vector<32x4xf32>
    %cst_34 = arith.constant dense<0.000000e+00> : vector<1x4xf32>
    %181 = tpu.matmul %177, %180, %cst_34 {dimension_numbers = #tpu.dot_dimension_numbers<[1], [0], [0], [1], [0, 0, 1, 1], [], []>} : vector<1x32xf32>, vector<32x4xf32>, vector<1x4xf32> -> vector<1x4xf32>
    %182 = arith.addf %179, %181 : vector<1x4xf32>
    %c0_35 = arith.constant 0 : index
    %c0_36 = arith.constant 0 : index
    %183 = vector.load %arg6[%c0_35, %c0_36] : memref<1x4xf32, #tpu.memory_space<vmem>>, vector<1x4xf32>
    %184 = arith.addf %182, %183 : vector<1x4xf32>
    %cst_37 = arith.constant dense<0xFF800000> : vector<1xf32>
    %185 = vector.multi_reduction <maximumf>, %184, %cst_37 [1] : vector<1x4xf32> to vector<1xf32>
    %186 = vector.shape_cast %185 : vector<1xf32> to vector<1x1xf32>
    %187 = vector.broadcast %186 : vector<1x1xf32> to vector<1x4xf32>
    %188 = arith.subf %184, %187 : vector<1x4xf32>
    %189 = math.exp %188 : vector<1x4xf32>
    %cst_38 = arith.constant dense<0.000000e+00> : vector<1xf32>
    %190 = vector.multi_reduction <add>, %189, %cst_38 [1] : vector<1x4xf32> to vector<1xf32>
    %191 = vector.shape_cast %190 : vector<1xf32> to vector<1x1xf32>
    %192 = math.log %191 : vector<1x1xf32>
    %193 = arith.addf %186, %192 : vector<1x1xf32>
    %194 = vector.broadcast %193 : vector<1x1xf32> to vector<1x4xf32>
    %195 = arith.subf %184, %194 : vector<1x4xf32>
    %c0_39 = arith.constant 0 : index
    %c0_40 = arith.constant 0 : index
    %196 = vector.load %arg7[%c0_39, %c0_40] : memref<1x4xf32, #tpu.memory_space<vmem>>, vector<1x4xf32>
    tpu.vector_store %arg7[%c0_39, %c0_40], %195 {strides = array<i32>} : memref<1x4xf32, #tpu.memory_space<vmem>>, vector<1x4xf32>,
    return
  }
  func.func @transform_0(%arg0: i32, %arg1: memref<8xi32, #tpu.memory_space<smem>>) -> (i32, i32) {
    %c0_i32 = arith.constant 0 : i32
    %c0_i32_0 = arith.constant 0 : i32
    %c0_i32_1 = arith.constant 0 : i32
    return %c0_i32, %c0_i32_0 : i32, i32
  }
  func.func @transform_1(%arg0: i32, %arg1: memref<8xi32, #tpu.memory_space<smem>>) -> (i32, i32) {
    %c0_i32 = arith.constant 0 : i32
    %c0_i32_0 = arith.constant 0 : i32
    %c0_i32_1 = arith.constant 0 : i32
    return %c0_i32, %c0_i32_0 : i32, i32
  }
  func.func @transform_2(%arg0: i32, %arg1: memref<8xi32, #tpu.memory_space<smem>>) -> (i32, i32) {
    %c0_i32 = arith.constant 0 : i32
    %c0_i32_0 = arith.constant 0 : i32
    %c0_i32_1 = arith.constant 0 : i32
    return %c0_i32, %c0_i32_0 : i32, i32
  }
  func.func @transform_3(%arg0: i32, %arg1: memref<8xi32, #tpu.memory_space<smem>>) -> (i32, i32) {
    %c0_i32 = arith.constant 0 : i32
    %c0_i32_0 = arith.constant 0 : i32
    %c0_i32_1 = arith.constant 0 : i32
    return %c0_i32, %c0_i32_0 : i32, i32
  }
  func.func @transform_4(%arg0: i32, %arg1: memref<8xi32, #tpu.memory_space<smem>>) -> (i32, i32) {
    %c0_i32 = arith.constant 0 : i32
    %c0_i32_0 = arith.constant 0 : i32
    %c0_i32_1 = arith.constant 0 : i32
    return %c0_i32, %c0_i32_0 : i32, i32
  }
  func.func @transform_5(%arg0: i32, %arg1: memref<8xi32, #tpu.memory_space<smem>>) -> (i32, i32) {
    %c0_i32 = arith.constant 0 : i32
    %c0_i32_0 = arith.constant 0 : i32
    %c0_i32_1 = arith.constant 0 : i32
    return %c0_i32, %c0_i32_0 : i32, i32
  }
}

</mosaic_0001>

<llo_original>
// kernel: tpu_custom_call.1
$region0: #{tpu_custom_call.1}
  #allocation0 [shape = 'u32[]', space=smem, size = 0x4, offset = 0x4, fixed_abs, tag = 'smem constant byte address 0x4 - core index']
  #allocation1 [shape = 'u32[72,128]{1,0:T(1,128)}', space=vmem, size = 0x9000, scoped, tag = 'internal scratch']
  #allocation2 [shape = 's32[1]{0}', space=sflag, size = 0x4, scoped, tag = 'scoped memory for tpu_custom_call.1']
  #allocation3 [shape = 'u8[512]{0}', space=smem, size = 0x200, scoped, tag = 'prefetched SMEM operand 0']
  %s0 = inlined_call_operand.vmem [shape: s32[8], index: 0, kind: input, shape index: {}]
  %s1 = inlined_call_operand.vmem [shape: f32[50,128], index: 1, kind: input, shape index: {}]
  %s2 = inlined_call_operand.hbm [shape: f32[50,128], index: 2, kind: input, shape index: {}]
  %s3 = inlined_call_operand.hbm [shape: f32[32,128], index: 3, kind: input, shape index: {}]
  %s4 = inlined_call_operand.vmem [shape: f32[64,4], index: 4, kind: input, shape index: {}]
  %s5 = inlined_call_operand.vmem [shape: f32[1,4], index: 5, kind: input, shape index: {}]
  %s6 = inlined_call_operand.hbm [shape: f32[1,4], index: 6, kind: output, shape index: {}]
  %s7 = sld [smem:[#allocation0]]
  $region38: #{tpu_custom_call.1} parent=0
    _
  %s9 = ssub.s32 1, %s7
  %s10 = scalar_select 0, %s9, %s7
  %s12 = sshll.u32 %s0, 4
  %s13 = int_to_ptr.vmem [resolvable:$true] %s12
  %15 = dma.vmem_to_smem %s13, 16, [#allocation3], [#allocation2]
  %17 = dma.done [#allocation2], 16
  %18 = sfence
  $region1: #{tpu_custom_call.1} parent=0
    #allocation4 [shape = 'u8[28672]{0}', space=vmem, size = 0x7000, scoped, tag = 'input window, operand 2, single buffered']
    #allocation5 [shape = 's32[1]{0}', space=sflag, size = 0x4, scoped, tag = 'scoped memory for tpu_custom_call.1']
    #allocation6 [shape = 's32[1]{0}', space=sflag, size = 0x4, scoped, tag = 'scoped memory for tpu_custom_call.1']
    #allocation7 [shape = 'u8[16384]{0}', space=vmem, size = 0x4000, scoped, tag = 'input window, operand 3, single buffered']
    #allocation8 [shape = 's32[1]{0}', space=sflag, size = 0x4, scoped, tag = 'scoped memory for tpu_custom_call.1']
    #allocation9 [shape = 'u8[512]{0}', space=vmem, size = 0x400, scoped, tag = 'output window, operand 0, single buffered']
    %19 = vsyncpa [#allocation5], 0
    %20 = vsyncpa [#allocation8], 0
    %21 = vsyncpa [#allocation6], 0
    // Predicated region
    $region2: #{tpu_custom_call.1} parent=1 // pred_check
      _
    $region3: #{tpu_custom_call.1} parent=1 // pred_check_branch
      %23 = sbr.rel (0) target = $region5
    $region4: #{tpu_custom_call.1} parent=1 // pred_region
      _
    $region5: #{tpu_custom_call.1} parent=1 // pred_fallthru
      _
    // Predicated region
    $region6: #{tpu_custom_call.1} parent=1 // pred_check
      _
    $region7: #{tpu_custom_call.1} parent=1 // pred_check_branch
      %25 = sbr.rel (0) target = $region9
    $region8: #{tpu_custom_call.1} parent=1 // pred_region
      %27 = vsyncadd [#allocation5], 0
      %s28 = sshll.u32 %s2, 4
      %s29 = int_to_ptr.hbm [resolvable:$true] %s28
      %s30 = sshll.u32 [#allocation4], 4
      %s31 = int_to_ptr.vmem [resolvable:$true] %s30
      %36 = dma.hbm_to_vmem [thread:$0]  %s29, 896, %s31, [#allocation5], 128, 128, 8
    $region9: #{tpu_custom_call.1} parent=1 // pred_fallthru
      _
    // Predicated region
    $region10: #{tpu_custom_call.1} parent=1 // pred_check
      _
    $region11: #{tpu_custom_call.1} parent=1 // pred_check_branch
      %38 = sbr.rel (0) target = $region13
    $region12: #{tpu_custom_call.1} parent=1 // pred_region
      %40 = vsyncadd [#allocation8], 0
      %s41 = sshll.u32 %s3, 4
      %s42 = int_to_ptr.hbm [resolvable:$true] %s41
      %s43 = sshll.u32 [#allocation7], 4
      %s44 = int_to_ptr.vmem [resolvable:$true] %s43
      %49 = dma.hbm_to_vmem [thread:$0]  %s42, 512, %s44, [#allocation8], 128, 128, 8
    $region13: #{tpu_custom_call.1} parent=1 // pred_fallthru
      _
    // Predicated region
    $region14: #{tpu_custom_call.1} parent=1 // pred_check
      _
    $region15: #{tpu_custom_call.1} parent=1 // pred_check_branch
      %51 = sbr.rel (0) target = $region17
    $region16: #{tpu_custom_call.1} parent=1 // pred_region
      _
    $region17: #{tpu_custom_call.1} parent=1 // pred_fallthru
      _
    // Predicated region
    $region18: #{tpu_custom_call.1} parent=1 // pred_check
      _
    $region19: #{tpu_custom_call.1} parent=1 // pred_check_branch
      %53 = sbr.rel (0) target = $region21
    $region20: #{tpu_custom_call.1} parent=1 // pred_region
      _
    $region21: #{tpu_custom_call.1} parent=1 // pred_fallthru
      _
    // Predicated region
    $region22: #{tpu_custom_call.1} parent=1 // pred_check
      _
    $region23: #{tpu_custom_call.1} parent=1 // pred_check_branch
      %55 = sbr.rel (0) target = $region25
    $region24: #{tpu_custom_call.1} parent=1 // pred_region
      %57 = dma.done [#allocation5], 896
    $region25: #{tpu_custom_call.1} parent=1 // pred_fallthru
      _
    // Predicated region
    $region26: #{tpu_custom_call.1} parent=1 // pred_check
      _
    $region27: #{tpu_custom_call.1} parent=1 // pred_check_branch
      %59 = sbr.rel (0) target = $region29
    $region28: #{tpu_custom_call.1} parent=1 // pred_region
      %61 = dma.done [#allocation8], 512
    $region29: #{tpu_custom_call.1} parent=1 // pred_fallthru
      _
    %v62 = vld [vmem:[#allocation7] sm:$0xff]
    %v63 = vld [vmem:[#allocation7 + $0x8] sm:$0xff]
    %v64 = vld [vmem:[#allocation7 + $0x10] sm:$0xff]
    %v65 = vld [vmem:[#allocation7 + $0x18] sm:$0xff]
    %s66 = sld [smem:[#allocation3]]
    %s67 = scalar_lea.vmem %s1, %s66
    %v68 = vld [vmem:[%s67] sm:$0x1]
    %vm69 = vcmask 261120
    %v71 = vsel %vm69, 0.0, 0
    %73 = vmatpush.msra.mxu0 0.0
    %74 = vmatpush.msra.mxu0 0.0
    %75 = vmatpush.msra.mxu0 0.0
    %76 = vmatpush.msra.mxu0 0.0
    %77 = vmatpush.msra.mxu0 0.0
    %78 = vmatpush.msra.mxu0 0.0
    %79 = vmatpush.msra.mxu0 0.0
    %80 = vmatpush.msra.mxu0 0.0
    %81 = vmatpush.msra.mxu0 0.0
    %82 = vmatpush.msra.mxu0 0.0
    %83 = vmatpush.msra.mxu0 0.0
    %84 = vmatpush.msra.mxu0 0.0
    %85 = vmatpush.msra.mxu0 %v65
    %86 = vmatpush.msra.mxu0 %v64
    %87 = vmatpush.msra.mxu0 %v63
    %88 = vmatpush.msra.mxu0 %v62
    %89 = vmatmul.f32.gmra.mxu0 %v71
    %v90 = vpop.f32.mrf.mxu0
    %v91 = vadd.f32 0.0, %v90
    %92 = vdwg.mxu0
    %v93 = vadd.f32 %v68, %v91
    %v94 = vxor.u32 %v93, 2147483648
    %v95 = vmul.f32 %v94, 1.442695
    %v96 = vpow.pop %v95
    %v97 = vadd.f32 %v96, 1.0
    %v98 = vrcp.pop %v97
    %v99 = vmul.f32 %v97, %v98
    %v100 = vsub.f32 1.0, %v99
    %v101 = vmul.f32 %v98, %v100
    %v102 = vadd.f32 %v98, %v101
    %vm103 = vweird.f32 %v97
    %vm104 = vweird.f32 %v98
    %vm105 = vmor %vm103, %vm104
    %v106 = vsel %vm105, %v98, %v102
    %v107 = vand.u32 2147483647, %v97
    %vm108 = vcmp.eq.f32.partialorder %v107, 8.507059e+37
    %v109 = vand.u32 %v97, 2147483648
    %v110 = vor.u32 1.1754944e-38, %v109
    %v111 = vsel %vm108, %v110, %v106
    %v112 = vmul.f32 1.0, %v111
    %v113 = vtanh.pop %v93
    %v114 = vmul.f32 %v112, 0.0
    %116 = vrot.lane.b32.xlu0 %v113, 64
    %v117 = vpop.permute.xlu0 %116
    %v119 = vmul.f32 %v112, %v117
    %121 = vrot.lane.b32.xlu0 %v119, 32
    %v122 = vpop.permute.xlu0 %121
    %v124 = vadd.f32 %v114, %v122
    %v125 = vtanh.pop %v124
    %127 = vrot.lane.b32.xlu0 %v125, 64
    %v128 = vpop.permute.xlu0 %127
    %v130 = vmul.f32 %v112, %v128
    %s131 = sld [smem:[#allocation3 + $0x1]]
    %s132 = scalar_lea.vmem %s1, %s131
    %v133 = vld [vmem:[%s132] sm:$0x1]
    %135 = vrot.lane.b32.xlu0 %v130, 32
    %v136 = vpop.permute.xlu0 %135
    %v137 = vsel %vm69, %v136, 0
    %139 = vmatpush.msra.mxu0 0.0
    %140 = vmatpush.msra.mxu0 0.0
    %141 = vmatpush.msra.mxu0 0.0
    %142 = vmatpush.msra.mxu0 0.0
    %143 = vmatpush.msra.mxu0 0.0
    %144 = vmatpush.msra.mxu0 0.0
    %145 = vmatpush.msra.mxu0 0.0
    %146 = vmatpush.msra.mxu0 0.0
    %147 = vmatpush.msra.mxu0 0.0
    %148 = vmatpush.msra.mxu0 0.0
    %149 = vmatpush.msra.mxu0 0.0
    %150 = vmatpush.msra.mxu0 0.0
    %151 = vmatpush.msra.mxu0 %v65
    %152 = vmatpush.msra.mxu0 %v64
    %153 = vmatpush.msra.mxu0 %v63
    %154 = vmatpush.msra.mxu0 %v62
    %155 = vmatmul.f32.gmra.mxu0 %v137
    %v156 = vpop.f32.mrf.mxu0
    %v157 = vadd.f32 0.0, %v156
    %158 = vdwg.mxu0
    %v159 = vadd.f32 %v133, %v157
    %v160 = vxor.u32 %v159, 2147483648
    %v161 = vmul.f32 %v160, 1.442695
    %v162 = vpow.pop %v161
    %v163 = vadd.f32 %v162, 1.0
    %v164 = vrcp.pop %v163
    %v165 = vmul.f32 %v163, %v164
    %v166 = vsub.f32 1.0, %v165
    %v167 = vmul.f32 %v164, %v166
    %v168 = vadd.f32 %v164, %v167
    %vm169 = vweird.f32 %v163
    %vm170 = vweird.f32 %v164
    %vm171 = vmor %vm169, %vm170
    %v172 = vsel %vm171, %v164, %v168
    %v173 = vand.u32 2147483647, %v163
    %vm174 = vcmp.eq.f32.partialorder %v173, 8.507059e+37
    %v175 = vand.u32 %v163, 2147483648
    %v176 = vor.u32 1.1754944e-38, %v175
    %v177 = vsel %vm174, %v176, %v172
    %v178 = vmul.f32 1.0, %v177
    %v179 = vtanh.pop %v159
    %v180 = vmul.f32 %v178, %v124
    %182 = vrot.lane.b32.xlu0 %v179, 64
    %v183 = vpop.permute.xlu0 %182
    %v185 = vmul.f32 %v178, %v183
    %187 = vrot.lane.b32.xlu0 %v185, 32
    %v188 = vpop.permute.xlu0 %187
    %v190 = vadd.f32 %v180, %v188
    %v191 = vtanh.pop %v190
    %193 = vrot.lane.b32.xlu0 %v191, 64
    %v194 = vpop.permute.xlu0 %193
    %v196 = vmul.f32 %v178, %v194
    %s197 = sld [smem:[#allocation3 + $0x2]]
    %s198 = scalar_lea.vmem %s1, %s197
    %v199 = vld [vmem:[%s198] sm:$0x1]
    %201 = vrot.lane.b32.xlu0 %v196, 32
    %v202 = vpop.permute.xlu0 %201
    %v203 = vsel %vm69, %v202, 0
    %205 = vmatpush.msra.mxu0 0.0
    %206 = vmatpush.msra.mxu0 0.0
    %207 = vmatpush.msra.mxu0 0.0
    %208 = vmatpush.msra.mxu0 0.0
    %209 = vmatpush.msra.mxu0 0.0
    %210 = vmatpush.msra.mxu0 0.0
    %211 = vmatpush.msra.mxu0 0.0
    %212 = vmatpush.msra.mxu0 0.0
    %213 = vmatpush.msra.mxu0 0.0
    %214 = vmatpush.msra.mxu0 0.0
    %215 = vmatpush.msra.mxu0 0.0
    %216 = vmatpush.msra.mxu0 0.0
    %217 = vmatpush.msra.mxu0 %v65
    %218 = vmatpush.msra.mxu0 %v64
    %219 = vmatpush.msra.mxu0 %v63
    %220 = vmatpush.msra.mxu0 %v62
    %221 = vmatmul.f32.gmra.mxu0 %v203
    %v222 = vpop.f32.mrf.mxu0
    %v223 = vadd.f32 0.0, %v222
    %224 = vdwg.mxu0
    %v225 = vadd.f32 %v199, %v223
    %v226 = vxor.u32 %v225, 2147483648
    %v227 = vmul.f32 %v226, 1.442695
    %v228 = vpow.pop %v227
    %v229 = vadd.f32 %v228, 1.0
    %v230 = vrcp.pop %v229
    %v231 = vmul.f32 %v229, %v230
    %v232 = vsub.f32 1.0, %v231
    %v233 = vmul.f32 %v230, %v232
    %v234 = vadd.f32 %v230, %v233
    %vm235 = vweird.f32 %v229
    %vm236 = vweird.f32 %v230
    %vm237 = vmor %vm235, %vm236
    %v238 = vsel %vm237, %v230, %v234
    %v239 = vand.u32 2147483647, %v229
    %vm240 = vcmp.eq.f32.partialorder %v239, 8.507059e+37
    %v241 = vand.u32 %v229, 2147483648
    %v242 = vor.u32 1.1754944e-38, %v241
    %v243 = vsel %vm240, %v242, %v238
    %v244 = vmul.f32 1.0, %v243
    %v245 = vtanh.pop %v225
    %v246 = vmul.f32 %v244, %v190
    %248 = vrot.lane.b32.xlu0 %v245, 64
    %v249 = vpop.permute.xlu0 %248
    %v251 = vmul.f32 %v244, %v249
    %253 = vrot.lane.b32.xlu0 %v251, 32
    %v254 = vpop.permute.xlu0 %253
    %v256 = vadd.f32 %v246, %v254
    %v257 = vtanh.pop %v256
    %259 = vrot.lane.b32.xlu0 %v257, 64
    %v260 = vpop.permute.xlu0 %259
    %v262 = vmul.f32 %v244, %v260
    %s263 = sld [smem:[#allocation3 + $0x3]]
    %s264 = scalar_lea.vmem %s1, %s263
    %v265 = vld [vmem:[%s264] sm:$0x1]
    %267 = vrot.lane.b32.xlu0 %v262, 32
    %v268 = vpop.permute.xlu0 %267
    %v269 = vsel %vm69, %v268, 0
    %271 = vmatpush.msra.mxu0 0.0
    %272 = vmatpush.msra.mxu0 0.0
    %273 = vmatpush.msra.mxu0 0.0
    %274 = vmatpush.msra.mxu0 0.0
    %275 = vmatpush.msra.mxu0 0.0
    %276 = vmatpush.msra.mxu0 0.0
    %277 = vmatpush.msra.mxu0 0.0
    %278 = vmatpush.msra.mxu0 0.0
    %279 = vmatpush.msra.mxu0 0.0
    %280 = vmatpush.msra.mxu0 0.0
    %281 = vmatpush.msra.mxu0 0.0
    %282 = vmatpush.msra.mxu0 0.0
    %283 = vmatpush.msra.mxu0 %v65
    %284 = vmatpush.msra.mxu0 %v64
    %285 = vmatpush.msra.mxu0 %v63
    %286 = vmatpush.msra.mxu0 %v62
    %287 = vmatmul.f32.gmra.mxu0 %v269
    %v288 = vpop.f32.mrf.mxu0
    %v289 = vadd.f32 0.0, %v288
    %290 = vdwg.mxu0
    %v291 = vadd.f32 %v265, %v289
    %v292 = vxor.u32 %v291, 2147483648
    %v293 = vmul.f32 %v292, 1.442695
    %v294 = vpow.pop %v293
    %v295 = vadd.f32 %v294, 1.0
    %v296 = vrcp.pop %v295
    %v297 = vmul.f32 %v295, %v296
    %v298 = vsub.f32 1.0, %v297
    %v299 = vmul.f32 %v296, %v298
    %v300 = vadd.f32 %v296, %v299
    %vm301 = vweird.f32 %v295
    %vm302 = vweird.f32 %v296
    %vm303 = vmor %vm301, %vm302
    %v304 = vsel %vm303, %v296, %v300
    %v305 = vand.u32 2147483647, %v295
    %vm306 = vcmp.eq.f32.partialorder %v305, 8.507059e+37
    %v307 = vand.u32 %v295, 2147483648
    %v308 = vor.u32 1.1754944e-38, %v307
    %v309 = vsel %vm306, %v308, %v304
    %v310 = vmul.f32 1.0, %v309
    %v311 = vtanh.pop %v291
    %v312 = vmul.f32 %v310, %v256
    %314 = vrot.lane.b32.xlu0 %v311, 64
    %v315 = vpop.permute.xlu0 %314
    %v317 = vmul.f32 %v310, %v315
    %319 = vrot.lane.b32.xlu0 %v317, 32
    %v320 = vpop.permute.xlu0 %319
    %v322 = vadd.f32 %v312, %v320
    %v323 = vtanh.pop %v322
    %325 = vrot.lane.b32.xlu0 %v323, 64
    %v326 = vpop.permute.xlu0 %325
    %v328 = vmul.f32 %v310, %v326
    %s329 = sld [smem:[#allocation3 + $0x4]]
    %s330 = scalar_lea.vmem %s1, %s329
    %v331 = vld [vmem:[%s330] sm:$0x1]
    %333 = vrot.lane.b32.xlu0 %v328, 32
    %v334 = vpop.permute.xlu0 %333
    %v335 = vsel %vm69, %v334, 0
    %337 = vmatpush.msra.mxu0 0.0
    %338 = vmatpush.msra.mxu0 0.0
    %339 = vmatpush.msra.mxu0 0.0
    %340 = vmatpush.msra.mxu0 0.0
    %341 = vmatpush.msra.mxu0 0.0
    %342 = vmatpush.msra.mxu0 0.0
    %343 = vmatpush.msra.mxu0 0.0
    %344 = vmatpush.msra.mxu0 0.0
    %345 = vmatpush.msra.mxu0 0.0
    %346 = vmatpush.msra.mxu0 0.0
    %347 = vmatpush.msra.mxu0 0.0
    %348 = vmatpush.msra.mxu0 0.0
    %349 = vmatpush.msra.mxu0 %v65
    %350 = vmatpush.msra.mxu0 %v64
    %351 = vmatpush.msra.mxu0 %v63
    %352 = vmatpush.msra.mxu0 %v62
    %353 = vmatmul.f32.gmra.mxu0 %v335
    %v354 = vpop.f32.mrf.mxu0
    %v355 = vadd.f32 0.0, %v354
    %356 = vdwg.mxu0
    %v357 = vadd.f32 %v331, %v355
    %v358 = vxor.u32 %v357, 2147483648
    %v359 = vmul.f32 %v358, 1.442695
    %v360 = vpow.pop %v359
    %v361 = vadd.f32 %v360, 1.0
    %v362 = vrcp.pop %v361
    %v363 = vmul.f32 %v361, %v362
    %v364 = vsub.f32 1.0, %v363
    %v365 = vmul.f32 %v362, %v364
    %v366 = vadd.f32 %v362, %v365
    %vm367 = vweird.f32 %v361
    %vm368 = vweird.f32 %v362
    %vm369 = vmor %vm367, %vm368
    %v370 = vsel %vm369, %v362, %v366
    %v371 = vand.u32 2147483647, %v361
    %vm372 = vcmp.eq.f32.partialorder %v371, 8.507059e+37
    %v373 = vand.u32 %v361, 2147483648
    %v374 = vor.u32 1.1754944e-38, %v373
    %v375 = vsel %vm372, %v374, %v370
    %v376 = vmul.f32 1.0, %v375
    %v377 = vtanh.pop %v357
    %v378 = vmul.f32 %v376, %v322
    %380 = vrot.lane.b32.xlu0 %v377, 64
    %v381 = vpop.permute.xlu0 %380
    %v383 = vmul.f32 %v376, %v381
    %385 = vrot.lane.b32.xlu0 %v383, 32
    %v386 = vpop.permute.xlu0 %385
    %v388 = vadd.f32 %v378, %v386
    %v389 = vtanh.pop %v388
    %391 = vrot.lane.b32.xlu0 %v389, 64
    %v392 = vpop.permute.xlu0 %391
    %v394 = vmul.f32 %v376, %v392
    %s395 = sld [smem:[#allocation3 + $0x5]]
    %s396 = scalar_lea.vmem %s1, %s395
    %v397 = vld [vmem:[%s396] sm:$0x1]
    %399 = vrot.lane.b32.xlu0 %v394, 32
    %v400 = vpop.permute.xlu0 %399
    %v401 = vsel %vm69, %v400, 0
    %403 = vmatpush.msra.mxu0 0.0
    %404 = vmatpush.msra.mxu0 0.0
    %405 = vmatpush.msra.mxu0 0.0
    %406 = vmatpush.msra.mxu0 0.0
    %407 = vmatpush.msra.mxu0 0.0
    %408 = vmatpush.msra.mxu0 0.0
    %409 = vmatpush.msra.mxu0 0.0
    %410 = vmatpush.msra.mxu0 0.0
    %411 = vmatpush.msra.mxu0 0.0
    %412 = vmatpush.msra.mxu0 0.0
    %413 = vmatpush.msra.mxu0 0.0
    %414 = vmatpush.msra.mxu0 0.0
    %415 = vmatpush.msra.mxu0 %v65
    %416 = vmatpush.msra.mxu0 %v64
    %417 = vmatpush.msra.mxu0 %v63
    %418 = vmatpush.msra.mxu0 %v62
    %419 = vmatmul.f32.gmra.mxu0 %v401
    %v420 = vpop.f32.mrf.mxu0
    %v421 = vadd.f32 0.0, %v420
    %422 = vdwg.mxu0
    %v423 = vadd.f32 %v397, %v421
    %v424 = vxor.u32 %v423, 2147483648
    %v425 = vmul.f32 %v424, 1.442695
    %v426 = vpow.pop %v425
    %v427 = vadd.f32 %v426, 1.0
    %v428 = vrcp.pop %v427
    %v429 = vmul.f32 %v427, %v428
    %v430 = vsub.f32 1.0, %v429
    %v431 = vmul.f32 %v428, %v430
    %v432 = vadd.f32 %v428, %v431
    %vm433 = vweird.f32 %v427
    %vm434 = vweird.f32 %v428
    %vm435 = vmor %vm433, %vm434
    %v436 = vsel %vm435, %v428, %v432
    %v437 = vand.u32 2147483647, %v427
    %vm438 = vcmp.eq.f32.partialorder %v437, 8.507059e+37
    %v439 = vand.u32 %v427, 2147483648
    %v440 = vor.u32 1.1754944e-38, %v439
    %v441 = vsel %vm438, %v440, %v436
    %v442 = vmul.f32 1.0, %v441
    %v443 = vtanh.pop %v423
    %v444 = vmul.f32 %v442, %v388
    %446 = vrot.lane.b32.xlu0 %v443, 64
    %v447 = vpop.permute.xlu0 %446
    %v449 = vmul.f32 %v442, %v447
    %451 = vrot.lane.b32.xlu0 %v449, 32
    %v452 = vpop.permute.xlu0 %451
    %v454 = vadd.f32 %v444, %v452
    %v455 = vtanh.pop %v454
    %457 = vrot.lane.b32.xlu0 %v455, 64
    %v458 = vpop.permute.xlu0 %457
    %v460 = vmul.f32 %v442, %v458
    %s461 = sld [smem:[#allocation3 + $0x6]]
    %s462 = scalar_lea.vmem %s1, %s461
    %v463 = vld [vmem:[%s462] sm:$0x1]
    %465 = vrot.lane.b32.xlu0 %v460, 32
    %v466 = vpop.permute.xlu0 %465
    %v467 = vsel %vm69, %v466, 0
    %469 = vmatpush.msra.mxu0 0.0
    %470 = vmatpush.msra.mxu0 0.0
    %471 = vmatpush.msra.mxu0 0.0
    %472 = vmatpush.msra.mxu0 0.0
    %473 = vmatpush.msra.mxu0 0.0
    %474 = vmatpush.msra.mxu0 0.0
    %475 = vmatpush.msra.mxu0 0.0
    %476 = vmatpush.msra.mxu0 0.0
    %477 = vmatpush.msra.mxu0 0.0
    %478 = vmatpush.msra.mxu0 0.0
    %479 = vmatpush.msra.mxu0 0.0
    %480 = vmatpush.msra.mxu0 0.0
    %481 = vmatpush.msra.mxu0 %v65
    %482 = vmatpush.msra.mxu0 %v64
    %483 = vmatpush.msra.mxu0 %v63
    %484 = vmatpush.msra.mxu0 %v62
    %485 = vmatmul.f32.gmra.mxu0 %v467
    %v486 = vpop.f32.mrf.mxu0
    %v487 = vadd.f32 0.0, %v486
    %488 = vdwg.mxu0
    %v489 = vadd.f32 %v463, %v487
    %v490 = vxor.u32 %v489, 2147483648
    %v491 = vmul.f32 %v490, 1.442695
    %v492 = vpow.pop %v491
    %v493 = vadd.f32 %v492, 1.0
    %v494 = vrcp.pop %v493
    %v495 = vmul.f32 %v493, %v494
    %v496 = vsub.f32 1.0, %v495
    %v497 = vmul.f32 %v494, %v496
    %v498 = vadd.f32 %v494, %v497
    %vm499 = vweird.f32 %v493
    %vm500 = vweird.f32 %v494
    %vm501 = vmor %vm499, %vm500
    %v502 = vsel %vm501, %v494, %v498
    %v503 = vand.u32 2147483647, %v493
    %vm504 = vcmp.eq.f32.partialorder %v503, 8.507059e+37
    %v505 = vand.u32 %v493, 2147483648
    %v506 = vor.u32 1.1754944e-38, %v505
    %v507 = vsel %vm504, %v506, %v502
    %v508 = vmul.f32 1.0, %v507
    %v509 = vtanh.pop %v489
    %v510 = vmul.f32 %v508, %v454
    %512 = vrot.lane.b32.xlu0 %v509, 64
    %v513 = vpop.permute.xlu0 %512
    %v515 = vmul.f32 %v508, %v513
    %517 = vrot.lane.b32.xlu0 %v515, 32
    %v518 = vpop.permute.xlu0 %517
    %v520 = vadd.f32 %v510, %v518
    %v521 = vtanh.pop %v520
    %523 = vrot.lane.b32.xlu0 %v521, 64
    %v524 = vpop.permute.xlu0 %523
    %v526 = vmul.f32 %v508, %v524
    %s527 = sld [smem:[#allocation3 + $0x7]]
    %s528 = scalar_lea.vmem %s1, %s527
    %v529 = vld [vmem:[%s528] sm:$0x1]
    %531 = vrot.lane.b32.xlu0 %v526, 32
    %v532 = vpop.permute.xlu0 %531
    %v533 = vsel %vm69, %v532, 0
    %535 = vmatpush.msra.mxu0 0.0
    %536 = vmatpush.msra.mxu0 0.0
    %537 = vmatpush.msra.mxu0 0.0
    %538 = vmatpush.msra.mxu0 0.0
    %539 = vmatpush.msra.mxu0 0.0
    %540 = vmatpush.msra.mxu0 0.0
    %541 = vmatpush.msra.mxu0 0.0
    %542 = vmatpush.msra.mxu0 0.0
    %543 = vmatpush.msra.mxu0 0.0
    %544 = vmatpush.msra.mxu0 0.0
    %545 = vmatpush.msra.mxu0 0.0
    %546 = vmatpush.msra.mxu0 0.0
    %547 = vmatpush.msra.mxu0 %v65
    %548 = vmatpush.msra.mxu0 %v64
    %549 = vmatpush.msra.mxu0 %v63
    %550 = vmatpush.msra.mxu0 %v62
    %551 = vmatmul.f32.gmra.mxu0 %v533
    %v552 = vpop.f32.mrf.mxu0
    %v553 = vadd.f32 0.0, %v552
    %554 = vdwg.mxu0
    %v555 = vadd.f32 %v529, %v553
    %v556 = vxor.u32 %v555, 2147483648
    %v557 = vmul.f32 %v556, 1.442695
    %v558 = vpow.pop %v557
    %v559 = vadd.f32 %v558, 1.0
    %v560 = vrcp.pop %v559
    %v561 = vmul.f32 %v559, %v560
    %v562 = vsub.f32 1.0, %v561
    %v563 = vmul.f32 %v560, %v562
    %v564 = vadd.f32 %v560, %v563
    %vm565 = vweird.f32 %v559
    %vm566 = vweird.f32 %v560
    %vm567 = vmor %vm565, %vm566
    %v568 = vsel %vm567, %v560, %v564
    %v569 = vand.u32 2147483647, %v559
    %vm570 = vcmp.eq.f32.partialorder %v569, 8.507059e+37
    %v571 = vand.u32 %v559, 2147483648
    %v572 = vor.u32 1.1754944e-38, %v571
    %v573 = vsel %vm570, %v572, %v568
    %v574 = vmul.f32 1.0, %v573
    %v575 = vtanh.pop %v555
    %v576 = vmul.f32 %v574, %v520
    %578 = vrot.lane.b32.xlu0 %v575, 64
    %v579 = vpop.permute.xlu0 %578
    %v581 = vmul.f32 %v574, %v579
    %583 = vrot.lane.b32.xlu0 %v581, 32
    %v584 = vpop.permute.xlu0 %583
    %v586 = vadd.f32 %v576, %v584
    %v587 = vtanh.pop %v586
    %589 = vrot.lane.b32.xlu0 %v587, 64
    %v590 = vpop.permute.xlu0 %589
    %v592 = vmul.f32 %v574, %v590
    %s593 = scalar_lea.vmem [#allocation4], %s527
    %v594 = vld [vmem:[%s593] sm:$0x1]
    %v595 = vxor.u32 %v594, 2147483648
    %v596 = vmul.f32 %v595, 1.442695
    %v597 = vpow.pop %v596
    %v598 = vadd.f32 %v597, 1.0
    %v599 = vrcp.pop %v598
    %v600 = vmul.f32 %v598, %v599
    %v601 = vsub.f32 1.0, %v600
    %v602 = vmul.f32 %v599, %v601
    %v603 = vadd.f32 %v599, %v602
    %vm604 = vweird.f32 %v598
    %vm605 = vweird.f32 %v599
    %vm606 = vmor %vm604, %vm605
    %v607 = vsel %vm606, %v599, %v603
    %v608 = vand.u32 2147483647, %v598
    %vm609 = vcmp.eq.f32.partialorder %v608, 8.507059e+37
    %v610 = vand.u32 %v598, 2147483648
    %v611 = vor.u32 1.1754944e-38, %v610
    %v612 = vsel %vm609, %v611, %v607
    %v613 = vmul.f32 1.0, %v612
    %v614 = vtanh.pop %v594
    %616 = vrot.lane.b32.xlu0 %v614, 64
    %v617 = vpop.permute.xlu0 %616
    %v619 = vmul.f32 %v613, %v617
    %v620 = vtanh.pop %v619
    %622 = vrot.lane.b32.xlu0 %v620, 96
    %v623 = vpop.permute.xlu0 %622
    %v625 = vmul.f32 %v613, %v623
    %v626 = vld [vmem:[%s4] sm:$0xff]
    %v627 = vld [vmem:[%s4 + $0x8] sm:$0xff]
    %v628 = vld [vmem:[%s4 + $0x10] sm:$0xff]
    %v629 = vld [vmem:[%s4 + $0x18] sm:$0xff]
    %v630 = vld [vmem:[%s4 + $0x20] sm:$0xff]
    %v631 = vld [vmem:[%s4 + $0x28] sm:$0xff]
    %v632 = vld [vmem:[%s4 + $0x30] sm:$0xff]
    %v633 = vld [vmem:[%s4 + $0x38] sm:$0xff]
    %635 = vrot.lane.b32.xlu0 %v625, 32
    %v636 = vpop.permute.xlu0 %635
    %v637 = vsel %vm69, %v636, 0
    %639 = vmatpush.msra.mxu0 0.0
    %640 = vmatpush.msra.mxu0 0.0
    %641 = vmatpush.msra.mxu0 0.0
    %642 = vmatpush.msra.mxu0 0.0
    %643 = vmatpush.msra.mxu0 0.0
    %644 = vmatpush.msra.mxu0 0.0
    %645 = vmatpush.msra.mxu0 0.0
    %646 = vmatpush.msra.mxu0 0.0
    %647 = vmatpush.msra.mxu0 0.0
    %648 = vmatpush.msra.mxu0 0.0
    %649 = vmatpush.msra.mxu0 0.0
    %650 = vmatpush.msra.mxu0 0.0
    %651 = vmatpush.msra.mxu0 %v633
    %652 = vmatpush.msra.mxu0 %v632
    %653 = vmatpush.msra.mxu0 %v631
    %654 = vmatpush.msra.mxu0 %v630
    %655 = vmatmul.f32.gmra.mxu0 %v637
    %v656 = vpop.f32.mrf.mxu0
    %v657 = vadd.f32 0.0, %v656
    %658 = vdwg.mxu0
    %660 = vrot.lane.b32.xlu0 %v592, 32
    %v661 = vpop.permute.xlu0 %660
    %v662 = vsel %vm69, %v661, 0
    %664 = vmatpush.msra.mxu0 0.0
    %665 = vmatpush.msra.mxu0 0.0
    %666 = vmatpush.msra.mxu0 0.0
    %667 = vmatpush.msra.mxu0 0.0
    %668 = vmatpush.msra.mxu0 0.0
    %669 = vmatpush.msra.mxu0 0.0
    %670 = vmatpush.msra.mxu0 0.0
    %671 = vmatpush.msra.mxu0 0.0
    %672 = vmatpush.msra.mxu0 0.0
    %673 = vmatpush.msra.mxu0 0.0
    %674 = vmatpush.msra.mxu0 0.0
    %675 = vmatpush.msra.mxu0 0.0
    %676 = vmatpush.msra.mxu0 %v629
    %677 = vmatpush.msra.mxu0 %v628
    %678 = vmatpush.msra.mxu0 %v627
    %679 = vmatpush.msra.mxu0 %v626
    %680 = vmatmul.f32.gmra.mxu0 %v662
    %v681 = vpop.f32.mrf.mxu0
    %v682 = vadd.f32 %v657, %v681
    %683 = vdwg.mxu0
    %v684 = vld [vmem:[%s5] sm:$0x1]
    %v685 = vadd.f32 %v682, %v684
    %vm686 = vcmask 24576
    %v687 = vsel %vm686, %v685, -inf
    %688 = vmax.xlane.f32.xlu0 %v687
    %v689 = vpop.xlane.xlu0 %688
    %v690 = vsub.f32 %v685, %v689
    %v691 = vmul.f32 %v690, 1.442695
    %v692 = vpow.pop %v691
    %v693 = vsel %vm686, %v692, 0.0
    %694 = vadd.xlane.f32.xlu0 %v693
    %v695 = vpop.xlane.xlu0 %694
    %v696 = vlog2.pop %v695
    %v697 = vmul.f32 %v696, 0.6931472
    %v698 = vadd.f32 %v689, %v697
    %v699 = vsub.f32 %v685, %v698
    %700 = vst.msk [vmem:[#allocation9] sm:$0x1] %vm686, %v699
    // Predicated region
    $region30: #{tpu_custom_call.1} parent=1 // pred_check
      _
    $region31: #{tpu_custom_call.1} parent=1 // pred_check_branch
      %702 = sbr.rel (0) target = $region33
    $region32: #{tpu_custom_call.1} parent=1 // pred_region
      %704 = vsyncadd [#allocation6], 0
      %s706 = sshll.u32 [#allocation9], 4
      %s707 = int_to_ptr.vmem [resolvable:$true] %s706
      %s708 = sshll.u32 %s6, 4
      %s709 = int_to_ptr.hbm [resolvable:$true] %s708
      %711 = dma.vmem_to_hbm [thread:$0]  %s707, 16, %s709, [#allocation6]
    $region33: #{tpu_custom_call.1} parent=1 // pred_fallthru
      _
    // Predicated region
    $region34: #{tpu_custom_call.1} parent=1 // pred_check
      _
    $region35: #{tpu_custom_call.1} parent=1 // pred_check_branch
      %713 = sbr.rel (0) target = $region37
    $region36: #{tpu_custom_call.1} parent=1 // pred_region
      %715 = dma.done [#allocation6], 16
    $region37: #{tpu_custom_call.1} parent=1 // pred_fallthru
      _
    %716 = vsyncpa [#allocation5], 1
    %717 = vsyncpa [#allocation8], 1
    %718 = vsyncpa [#allocation6], 1

</llo_original>
